<compile_context>
chip_gen: v7x
topology: tpu7x:2x2x1
jax: 0.10.0
libtpu: 0.0.40
codegen_flags: <defaults>
</compile_context>

<pallas_src>
import functools

import numpy as np

import jax
import jax.numpy as jnp
from jax.experimental import pallas as pl
from jax.experimental.pallas import tpu as pltpu

EPS = 1e-5
NUM_CLASSES = 625
NUM_CLASSES_PAD = 640                       # multiple of 128 lanes
VMEM_LIMIT_BYTES = 48 * 1024 * 1024

# Direction convention of pltpu.roll, probed on-device once in __main__ so the
# conv kernels never depend on an assumed sign.  +1 == same as jnp.roll.
_ROLL_SIGN = 1


# ----------------------------------------------------------------------------
# Static per-stage geometry
# ----------------------------------------------------------------------------
def _geom(H, W):
    Hp, Wp = H + 2, W + 2                   # zero-padded spatial grid
    S = Hp * Wp                             # flattened padded spatial size
    SL = ((S + 127) // 128) * 128           # lane-aligned storage size
    offsets = tuple((dy - 1) * Wp + (dx - 1)
                    for dy in range(3) for dx in range(3))
    return dict(H=H, W=W, Hp=Hp, Wp=Wp, S=S, SL=SL, offsets=offsets)


STAGE_HW = {0: (128, 64), 1: (64, 32), 2: (32, 16), 3: (16, 8)}
GEOMS = {k: _geom(*hw) for k, hw in STAGE_HW.items()}

LAYER_STAGES = {"layer1": (1, 1), "layer2": (1, 2), "layer3": (2, 3)}
BLOCK_DOWNSAMPLE = {"layer1": [False, False],
                    "layer2": [True, False],
                    "layer3": [True, False]}


# ----------------------------------------------------------------------------
# Pallas kernels
# ----------------------------------------------------------------------------
def _apply_act(y, act):
    if act == "relu":
        return jnp.maximum(y, 0.0)
    if act == "elu":                        # ELU(alpha=1)
        return jnp.where(y > 0.0, y, jnp.exp(jnp.minimum(y, 0.0)) - 1.0)
    return y


def _conv_cm_kernel(x_ref, w_ref, s_ref, b_ref, m_ref, *rest,
                    shifts, act, fuse_pool, pool_shifts):
    """Fused conv (T taps) + BN affine + activation (+residual) (+3x3 maxpool).

    x_ref : (1, Cin, SL)  bf16   channel-major padded activation
    w_ref : (T, Cout, Cin) bf16  per-tap weight matrices
    s_ref : (Cout, 1) f32        folded BN scale
    b_ref : (Cout, 1) f32        folded BN shift (incl. conv bias)
    m_ref : (1, SL)  f32         1.0 on valid (interior) spatial positions
    rest  : [res_ref (1,Cout,SL) bf16,]  o_ref (1,Cout,SL) bf16
    """
    if len(rest) == 2:
        res_ref, o_ref = rest
    else:
        res_ref = None
        o_ref = rest[0]

    x = x_ref[0]                                          # (Cin, SL) bf16
    acc = None
    for t, sh in enumerate(shifts):
        xt = x if sh == 0 else pltpu.roll(x, sh, 1)       # lane rotation (XLU)
        d = jnp.dot(w_ref[t], xt, preferred_element_type=jnp.float32)
        acc = d if acc is None else acc + d               # (Cout, SL) f32

    y = acc * s_ref[...] + b_ref[...]
    if res_ref is not None:
        y = y + res_ref[0].astype(jnp.float32)
    y = _apply_act(y, act)

    valid = m_ref[...] > 0.5                              # (1, SL) bool
    yb = y.astype(o_ref.dtype)
    if fuse_pool:
        # 3x3 stride-1 max pool on the padded grid; pad positions act as -inf.
        yb = jnp.where(valid, yb, jnp.asarray(-1e30, o_ref.dtype))
        pooled = yb
        for sh in pool_shifts:
            pooled = jnp.maximum(pooled, pltpu.roll(yb, sh, 1))
        yb = pooled
    # Zero padding positions so the output is directly the next layer's input.
    o_ref[0] = jnp.where(valid, yb, jnp.asarray(0.0, o_ref.dtype))


def _fc_kernel(x_ref, w_ref, s_ref, b_ref, o_ref, *, act):
    """y = act((x @ w) * scale + shift) — single-block matmul (dense / cls)."""
    y = jnp.dot(x_ref[...], w_ref[...], preferred_element_type=jnp.float32)
    y = y * s_ref[...] + b_ref[...]
    o_ref[...] = _apply_act(y, act).astype(o_ref.dtype)


# ----------------------------------------------------------------------------
# Pallas wrappers
# ----------------------------------------------------------------------------
def conv_cm(x, cp, mask, offsets, *, act="none", residual=None,
            fuse_pool=False, pool_offsets=()):
    N, Cin, SL = x.shape
    T, Cout, Cin_w = cp["w"].shape
    assert Cin == Cin_w and T == len(offsets)
    shifts = tuple(int(((-o) * _ROLL_SIGN) % SL) for o in offsets)
    pool_shifts = tuple(int(((-o) * _ROLL_SIGN) % SL)
                        for o in pool_offsets if o != 0)

    kernel = functools.partial(_conv_cm_kernel, shifts=shifts, act=act,
                               fuse_pool=fuse_pool, pool_shifts=pool_shifts)

    in_specs = [
        pl.BlockSpec((1, Cin, SL), lambda n: (n, 0, 0)),
        pl.BlockSpec((T, Cout, Cin_w), lambda n: (0, 0, 0)),
        pl.BlockSpec((Cout, 1), lambda n: (0, 0)),
        pl.BlockSpec((Cout, 1), lambda n: (0, 0)),
        pl.BlockSpec((1, SL), lambda n: (0, 0)),
    ]
    args = [x, cp["w"], cp["scale"], cp["shift"], mask]
    if residual is not None:
        in_specs.append(pl.BlockSpec((1, Cout, SL), lambda n: (n, 0, 0)))
        args.append(residual)

    return pl.pallas_call(
        kernel,
        out_shape=jax.ShapeDtypeStruct((N, Cout, SL), jnp.bfloat16),
        grid_spec=pltpu.PrefetchScalarGridSpec(
            num_scalar_prefetch=0,
            grid=(N,),
            in_specs=in_specs,
            out_specs=pl.BlockSpec((1, Cout, SL), lambda n: (n, 0, 0)),
        ),
        compiler_params=pltpu.CompilerParams(
            dimension_semantics=("parallel",),            # megacore over batch
            vmem_limit_bytes=VMEM_LIMIT_BYTES),
    )(*args)


def fc(x, w, scale, shift, *, act="none"):
    M, K = x.shape
    K2, Nc = w.shape
    assert K == K2
    return pl.pallas_call(
        functools.partial(_fc_kernel, act=act),
        out_shape=jax.ShapeDtypeStruct((M, Nc), jnp.float32),
        grid_spec=pltpu.PrefetchScalarGridSpec(
            num_scalar_prefetch=0,
            grid=(1,),
            in_specs=[pl.BlockSpec((M, K), lambda i: (0, 0)),
                      pl.BlockSpec((K, Nc), lambda i: (0, 0)),
                      pl.BlockSpec((1, Nc), lambda i: (0, 0)),
                      pl.BlockSpec((1, Nc), lambda i: (0, 0))],
            out_specs=pl.BlockSpec((M, Nc), lambda i: (0, 0)),
        ),
        compiler_params=pltpu.CompilerParams(
            dimension_semantics=("arbitrary",),
            vmem_limit_bytes=VMEM_LIMIT_BYTES),
    )(x, w, scale, shift)


# ----------------------------------------------------------------------------
# Thin XLA glue between stages (tiny tensors; not kernels)
# ----------------------------------------------------------------------------
def subsample_repad(a, g_in, g_out):
    """Take padded-grid positions (2r+1, 2c+1) and rebuild the next stage's
    padded channel-major layout (stride-2 convs / stride-2 part of maxpool)."""
    N, C, _ = a.shape
    v = a[:, :, :g_in["S"]].reshape(N, C, g_in["Hp"], g_in["Wp"])
    v = v[:, :, 1:1 + 2 * g_out["H"]:2, 1:1 + 2 * g_out["W"]:2]
    v = jnp.pad(v, ((0, 0), (0, 0), (1, 1), (1, 1)))
    v = v.reshape(N, C, g_out["S"])
    return jnp.pad(v, ((0, 0), (0, 0), (0, g_out["SL"] - g_out["S"])))


def basic_block_cm(x, blk, masks, g_in, g_out, is_down):
    m_in, m_out = masks
    # conv1+BN+ReLU (stride-2 blocks are computed at stride 1 and subsampled)
    y = conv_cm(x, blk["conv1"], m_in, g_in["offsets"], act="relu")
    if is_down:
        y = subsample_repad(y, g_in, g_out)
        xs = subsample_repad(x, g_in, g_out)              # 1x1 stride-2 input
        res = conv_cm(xs, blk["down"], m_out, (0,), act="none")
    else:
        res = x
    # relu(residual + bn2(conv2(y))) fused in the kernel epilogue
    return conv_cm(y, blk["conv2"], m_out, g_out["offsets"], act="relu",
                   residual=res)


def net_original_forward(x_nchw, pp, reid=False):
    N, C, H, W = x_nchw.shape
    assert (H, W) == STAGE_HW[0] and C == 3
    g0 = GEOMS[0]

    # Build the stage-0 channel-major padded layout (pad Cin 3 -> 16; the
    # padded weight channels are zero).
    xp = jnp.pad(x_nchw.astype(jnp.float32), ((0, 0), (0, 0), (1, 1), (1, 1)))
    xp = xp.reshape(N, C, g0["S"])
    xp = jnp.pad(xp, ((0, 0), (0, 16 - C), (0, g0["SL"] - g0["S"])))
    x = xp.astype(jnp.bfloat16)

    # stem: Conv(3,32)+BN+ELU, Conv(32,32)+BN+ELU with fused 3x3 MaxPool
    x = conv_cm(x, pp["conv_a"], pp["mask0"], g0["offsets"], act="elu")
    x = conv_cm(x, pp["conv_b"], pp["mask0"], g0["offsets"], act="elu",
                fuse_pool=True, pool_offsets=g0["offsets"])
    x = subsample_repad(x, g0, GEOMS[1])                  # stride-2 of the pool

    for lname in ("layer1", "layer2", "layer3"):
        s_in, s_out = LAYER_STAGES[lname]
        for bi, blk in enumerate(pp[lname]):
            si = s_in if bi == 0 else s_out
            x = basic_block_cm(x, blk,
                               (pp["mask%d" % si], pp["mask%d" % s_out]),
                               GEOMS[si], GEOMS[s_out],
                               BLOCK_DOWNSAMPLE[lname][bi])

    # flatten in PyTorch (N, C, H, W) order
    g3 = GEOMS[3]
    v = x[:, :, :g3["S"]].reshape(N, 128, g3["Hp"], g3["Wp"])
    v = v[:, :, 1:1 + g3["H"], 1:1 + g3["W"]].reshape(N, 128 * g3["H"] * g3["W"])

    if reid:
        # Dropout (eval: identity) -> Linear -> L2 normalize (with epsilon)
        f = fc(v, pp["dense_w"], pp["reid_scale"], pp["reid_shift"], act="none")
        return f / (jnp.linalg.norm(f, axis=1, keepdims=True) + 1e-12)

    # dense: Dropout (identity) -> Linear(16384,128) -> BN1d -> ELU (fused)
    h = fc(v, pp["dense_w"], pp["dense_scale"], pp["dense_shift"], act="elu")
    # classifier: Linear(128, 625), padded to 640 lanes and sliced back
    logits = fc(h.astype(jnp.bfloat16), pp["cls_w"], pp["cls_scale"],
                pp["cls_shift"], act="none")
    return logits[:, :NUM_CLASSES]


# ----------------------------------------------------------------------------
# One-time parameter preparation (hoisted out of the jitted forward)
# ----------------------------------------------------------------------------
def _fold_bn(bn, bias=None):
    scale = bn["gamma"] / jnp.sqrt(bn["var"] + EPS)
    b = bias if bias is not None else 0.0
    shift = (b - bn["mean"]) * scale + bn["beta"]
    return scale, shift


def _prep_conv(w_oihw, bn, bias=None, cin_pad=None):
    Cout, Cin, kh, kw = w_oihw.shape
    w = jnp.transpose(w_oihw, (2, 3, 0, 1)).reshape(kh * kw, Cout, Cin)
    if cin_pad is not None and cin_pad > Cin:
        w = jnp.pad(w, ((0, 0), (0, 0), (0, cin_pad - Cin)))
    scale, shift = _fold_bn(bn, bias)
    return dict(w=w.astype(jnp.bfloat16),
                scale=scale.reshape(-1, 1).astype(jnp.float32),
                shift=shift.reshape(-1, 1).astype(jnp.float32))


def _stage_mask(g):
    m = np.zeros((g["Hp"], g["Wp"]), np.float32)
    m[1:1 + g["H"], 1:1 + g["W"]] = 1.0
    m = np.pad(m.reshape(1, -1), ((0, 0), (0, g["SL"] - g["S"])))
    return jnp.asarray(m)


def prepare_params(p):
    pp = {
        "conv_a": _prep_conv(p["conv_a_w"], p["bn_a"], bias=p["conv_a_b"],
                             cin_pad=16),
        "conv_b": _prep_conv(p["conv_b_w"], p["bn_b"], bias=p["conv_b_b"]),
    }
    for lname in ("layer1", "layer2", "layer3"):
        blocks = []
        for blk in p[lname]:
            nb = {"conv1": _prep_conv(blk["conv1_w"], blk["bn1"]),
                  "conv2": _prep_conv(blk["conv2_w"], blk["bn2"])}
            if "down_w" in blk:
                nb["down"] = _prep_conv(blk["down_w"], blk["down_bn"])
            blocks.append(nb)
        pp[lname] = blocks

    dscale, dshift = _fold_bn(p["dense_bn"], bias=p["dense_b"])
    pp["dense_w"] = jnp.transpose(p["dense_w"]).astype(jnp.bfloat16)
    pp["dense_scale"] = dscale.reshape(1, -1).astype(jnp.float32)
    pp["dense_shift"] = dshift.reshape(1, -1).astype(jnp.float32)
    pp["reid_scale"] = jnp.ones((1, 128), jnp.float32)
    pp["reid_shift"] = p["dense_b"].reshape(1, -1).astype(jnp.float32)

    cw = jnp.transpose(p["cls_w"]).astype(jnp.bfloat16)          # (128, 625)
    pp["cls_w"] = jnp.pad(cw, ((0, 0), (0, NUM_CLASSES_PAD - NUM_CLASSES)))
    pp["cls_scale"] = jnp.ones((1, NUM_CLASSES_PAD), jnp.float32)
    pp["cls_shift"] = jnp.pad(
        p["cls_b"], (0, NUM_CLASSES_PAD - NUM_CLASSES)
    ).reshape(1, -1).astype(jnp.float32)

    for i, g in GEOMS.items():
        pp["mask%d" % i] = _stage_mask(g)
    return pp


# ----------------------------------------------------------------------------
# pltpu.roll direction probe (tiny one-time kernel)
# ----------------------------------------------------------------------------
def _detect_roll_sign():
    x = jnp.arange(8 * 256, dtype=jnp.float32).reshape(8, 256)

    def _probe(x_ref, o_ref):
        o_ref[...] = pltpu.roll(x_ref[...], 1, 1)

    y = pl.pallas_call(
        _probe, out_shape=jax.ShapeDtypeStruct((8, 256), jnp.float32))(x)
    if bool(jnp.array_equal(y, jnp.roll(x, 1, axis=1))):
        return 1
    if bool(jnp.array_equal(y, jnp.roll(x, -1, axis=1))):
        return -1
    return 1


# ----------------------------------------------------------------------------
# Pure-JAX f32 reference (eval mode) — used only for a numerical sanity check
# ----------------------------------------------------------------------------
def _ref_bn(x, bn):
    s = (bn["gamma"] / jnp.sqrt(bn["var"] + EPS)).reshape(1, -1, 1, 1)
    return (x - bn["mean"].reshape(1, -1, 1, 1)) * s + bn["beta"].reshape(1, -1, 1, 1)


def _ref_conv(x, w, b, stride, pad):
    y = jax.lax.conv_general_dilated(
        x, w, (stride, stride), ((pad, pad), (pad, pad)),
        dimension_numbers=("NCHW", "OIHW", "NCHW"))
    if b is not None:
        y = y + b.reshape(1, -1, 1, 1)
    return y


def _ref_elu(x):
    return jnp.where(x > 0, x, jnp.exp(jnp.minimum(x, 0.0)) - 1.0)


def reference_forward(x, p):
    x = _ref_elu(_ref_bn(_ref_conv(x, p["conv_a_w"], p["conv_a_b"], 1, 1), p["bn_a"]))
    x = _ref_elu(_ref_bn(_ref_conv(x, p["conv_b_w"], p["conv_b_b"], 1, 1), p["bn_b"]))
    x = jax.lax.reduce_window(x, -jnp.inf, jax.lax.max, (1, 1, 3, 3),
                              (1, 1, 2, 2), ((0, 0), (0, 0), (1, 1), (1, 1)))
    for lname in ("layer1", "layer2", "layer3"):
        for blk, is_down in zip(p[lname], BLOCK_DOWNSAMPLE[lname]):
            stride = 2 if is_down else 1
            y = jax.nn.relu(_ref_bn(_ref_conv(x, blk["conv1_w"], None, stride, 1),
                                    blk["bn1"]))
            y = _ref_bn(_ref_conv(y, blk["conv2_w"], None, 1, 1), blk["bn2"])
            if "down_w" in blk:
                x = _ref_bn(_ref_conv(x, blk["down_w"], None, stride, 0),
                            blk["down_bn"])
            x = jax.nn.relu(x + y)
    n = x.shape[0]
    x = x.reshape(n, -1)
    h = x @ p["dense_w"].T + p["dense_b"]
    dbn = p["dense_bn"]
    h = (h - dbn["mean"]) * (dbn["gamma"] / jnp.sqrt(dbn["var"] + EPS)) + dbn["beta"]
    h = _ref_elu(h)
    return h @ p["cls_w"].T + p["cls_b"]


# ----------------------------------------------------------------------------
# Deterministic parameter initialization (synthetic; no checkpoint loading)
# ----------------------------------------------------------------------------
def init_params(key):
    kit = iter(jax.random.split(key, 128))

    def conv_w(co, ci, k):
        fan = ci * k * k
        return jax.random.normal(next(kit), (co, ci, k, k),
                                 jnp.float32) * (1.0 / (fan ** 0.5))

    def bn(c):
        return dict(
            gamma=1.0 + 0.1 * jax.random.normal(next(kit), (c,), jnp.float32),
            beta=0.1 * jax.random.normal(next(kit), (c,), jnp.float32),
            mean=0.1 * jax.random.normal(next(kit), (c,), jnp.float32),
            var=0.5 + jax.random.uniform(next(kit), (c,), jnp.float32),
        )

    def block(ci, co, is_down):
        b = dict(conv1_w=conv_w(co, ci, 3), bn1=bn(co),
                 conv2_w=conv_w(co, co, 3), bn2=bn(co))
        if is_down or ci != co:
            b["down_w"] = conv_w(co, ci, 1)
            b["down_bn"] = bn(co)
        return b

    din = 128 * 16 * 8
    return dict(
        conv_a_w=conv_w(32, 3, 3),
        conv_a_b=0.1 * jax.random.normal(next(kit), (32,), jnp.float32),
        bn_a=bn(32),
        conv_b_w=conv_w(32, 32, 3),
        conv_b_b=0.1 * jax.random.normal(next(kit), (32,), jnp.float32),
        bn_b=bn(32),
        layer1=[block(32, 32, False), block(32, 32, False)],
        layer2=[block(32, 64, True), block(64, 64, False)],
        layer3=[block(64, 128, True), block(128, 128, False)],
        dense_w=jax.random.normal(next(kit), (128, din),
                                  jnp.float32) * (1.0 / (din ** 0.5)),
        dense_b=0.1 * jax.random.normal(next(kit), (128,), jnp.float32),
        dense_bn=bn(128),
        cls_w=jax.random.normal(next(kit), (NUM_CLASSES, 128),
                                jnp.float32) * (1.0 / (128 ** 0.5)),
        cls_b=0.1 * jax.random.normal(next(kit), (NUM_CLASSES,), jnp.float32),
    )


if __name__ == "__main__":
    _ROLL_SIGN = _detect_roll_sign()

    # Input spatial size 128x64 is dictated by Linear(128*16*8, 128).
    params = init_params(jax.random.PRNGKey(1))
    prepped = prepare_params(params)
    x = jax.random.normal(jax.random.PRNGKey(0), (2, 3, 128, 64), jnp.float32)

    fwd = jax.jit(lambda a, b: net_original_forward(a, b, reid=False))
    out = jax.block_until_ready(fwd(x, prepped))

    assert out.shape == (2, NUM_CLASSES), out.shape
    assert bool(jnp.all(jnp.isfinite(out)))

    # Numerical check against the pure-JAX f32 reference (bf16 pipeline =>
    # loose, scale-relative tolerance).
    ref = reference_forward(x, params)
    rel_err = float(jnp.max(jnp.abs(out - ref)) / (jnp.max(jnp.abs(ref)) + 1e-6))
    assert rel_err < 0.15, rel_err

    print("KERNEL_OK")
</pallas_src>

<mosaic_0001>
module attributes {stable_mosaic.version = 11 : i64} {
  func.func @_probe(%arg0: memref<8x256xf32, #tpu.memory_space<vmem>>, %arg1: memref<8x256xf32, #tpu.memory_space<vmem>>) attributes {dimension_semantics = [], scalar_prefetch = 0 : i64, scratch_operands = 0 : i64, tpu.core_type = #tpu.core_type<tc>} {
    %c0 = arith.constant 0 : index
    %c0_0 = arith.constant 0 : index
    %0 = vector.load %arg0[%c0, %c0_0] : memref<8x256xf32, #tpu.memory_space<vmem>>, vector<8x256xf32>
    %c1_i32 = arith.constant 1 : i32
    %1 = tpu.dynamic_rotate %0 by %c1_i32 dim 1 : vector<8x256xf32>, i32 -> vector<8x256xf32>
    %c0_1 = arith.constant 0 : index
    %c0_2 = arith.constant 0 : index
    %2 = vector.load %arg1[%c0_1, %c0_2] : memref<8x256xf32, #tpu.memory_space<vmem>>, vector<8x256xf32>
    tpu.vector_store %arg1[%c0_1, %c0_2], %1 {strides = array<i32>} : memref<8x256xf32, #tpu.memory_space<vmem>>, vector<8x256xf32>,
    return
  }
}

</mosaic_0001>

<llo_original>
// kernel: tpu_custom_call.1
$region0: #{tpu_custom_call.1}
  #allocation0 [shape = 'u32[]', space=smem, size = 0x4, offset = 0x4, fixed_abs, tag = 'smem constant byte address 0x4 - core index']
  #allocation1 [shape = 'u32[144,128]{1,0:T(1,128)}', space=vmem, size = 0x12000, scoped, tag = 'internal scratch']
  %s0 = inlined_call_operand.hbm [shape: f32[8,256], index: 0, kind: input, shape index: {}]
  %s1 = inlined_call_operand.hbm [shape: f32[8,256], index: 1, kind: output, shape index: {}]
  %s2 = sld [smem:[#allocation0]]
  $region18: #{tpu_custom_call.1} parent=0
    _
  %s4 = ssub.s32 1, %s2
  %s5 = scalar_select 0, %s4, %s2
  $region1: #{tpu_custom_call.1} parent=0
    #allocation2 [shape = 'u8[8192]{0}', space=vmem, size = 0x2000, scoped, tag = 'input window, operand 0, single buffered']
    #allocation3 [shape = 's32[1]{0}', space=sflag, size = 0x4, scoped, tag = 'scoped memory for tpu_custom_call.1']
    #allocation4 [shape = 's32[1]{0}', space=sflag, size = 0x4, scoped, tag = 'scoped memory for tpu_custom_call.1']
    #allocation5 [shape = 'u8[8192]{0}', space=vmem, size = 0x2000, scoped, tag = 'output window, operand 0, single buffered']
    %6 = vsyncpa [#allocation3], 0
    %7 = vsyncpa [#allocation4], 0
    // Predicated region
    $region2: #{tpu_custom_call.1} parent=1 // pred_check
      _
    $region3: #{tpu_custom_call.1} parent=1 // pred_check_branch
      %9 = sbr.rel (0) target = $region5
    $region4: #{tpu_custom_call.1} parent=1 // pred_region
      %s11 = ssub.s32 256, 256
      %12 = vsyncadd [#allocation3], %s11
      %s14 = sshll.u32 [#allocation2], 4
      %s15 = int_to_ptr.vmem [resolvable:$true] %s14
      %17 = dma.hbm_to_vmem [thread:$0]  %s0, 256, %s15, [#allocation3]
    $region5: #{tpu_custom_call.1} parent=1 // pred_fallthru
      _
    // Predicated region
    $region6: #{tpu_custom_call.1} parent=1 // pred_check
      _
    $region7: #{tpu_custom_call.1} parent=1 // pred_check_branch
      %19 = sbr.rel (0) target = $region9
    $region8: #{tpu_custom_call.1} parent=1 // pred_region
      %20 = dma.done [#allocation3], 256
    $region9: #{tpu_custom_call.1} parent=1 // pred_fallthru
      _
    %v21 = vld [vmem:[#allocation2] sm:$0xff]
    %v22 = vld [vmem:[#allocation2 + $0x8] sm:$0xff]
    %23 = vrot.lane.b32.xlu0 %v21, 1
    %v24 = vpop.permute.xlu0 %23
    %25 = vrot.lane.b32.xlu0 %v22, 1
    %v26 = vpop.permute.xlu0 %25
    %v27 = vlaneseq
    %v28 = vand.u32 %v27, 127
    %vm29 = vcmp.lt.s32.totalorder %v28, 1
    %v30 = vsel %vm29, %v24, %v26
    %v31 = vsel %vm29, %v26, %v24
    %32 = vst [vmem:[#allocation5] sm:$0xff] %v31
    %33 = vst [vmem:[#allocation5 + $0x8] sm:$0xff] %v30
    // Predicated region
    $region10: #{tpu_custom_call.1} parent=1 // pred_check
      _
    $region11: #{tpu_custom_call.1} parent=1 // pred_check_branch
      %35 = sbr.rel (0) target = $region13
    $region12: #{tpu_custom_call.1} parent=1 // pred_region
      %s37 = ssub.s32 256, 256
      %38 = vsyncadd [#allocation4], %s37
      %s40 = sshll.u32 [#allocation5], 4
      %s41 = int_to_ptr.vmem [resolvable:$true] %s40
      %43 = dma.vmem_to_hbm [thread:$0]  %s41, 256, %s1, [#allocation4]
    $region13: #{tpu_custom_call.1} parent=1 // pred_fallthru
      _
    // Predicated region
    $region14: #{tpu_custom_call.1} parent=1 // pred_check
      _
    $region15: #{tpu_custom_call.1} parent=1 // pred_check_branch
      %45 = sbr.rel (0) target = $region17
    $region16: #{tpu_custom_call.1} parent=1 // pred_region
      %46 = dma.done [#allocation4], 256
    $region17: #{tpu_custom_call.1} parent=1 // pred_fallthru
      _
    %47 = vsyncpa [#allocation3], 1
    %48 = vsyncpa [#allocation4], 1

</llo_original>
